<compile_context>
chip_gen: v6e
topology: v6e:2x2x1
jax: 0.10.0
libtpu: 0.0.40
codegen_flags: <defaults>
</compile_context>

<pallas_src>
import functools

import jax
import jax.numpy as jnp
import numpy as np
from jax.experimental import pallas as pl
from jax.experimental.pallas import tpu as pltpu


# ---------------------------------------------------------------------------
# Pallas kernel
# ---------------------------------------------------------------------------
def _cost_kernel(logits_ref, seg_ref, len_ref, onehot_ref, tgt_seg_ref, out_ref,
                 *, w_class, w_segment, w_siou):
    logits = logits_ref[...].astype(jnp.float32)     # [Bb, Q, C]
    out_seg = seg_ref[...]                           # [Bb, Q, 2]  normalized
    length = len_ref[...]                            # [Bb, 1, 1]
    onehot = onehot_ref[...].astype(jnp.float32)     # [Bb, C, Tp] (bf16 in HBM, exact 0/1)
    tgt = tgt_seg_ref[...]                           # [Bb, 2, Tp] rows = start / end

    # cost_class = -softmax(logits)[:, tgt_ids]; gather expressed as one-hot matmul (MXU),
    # softmax normalization deferred until after the matmul (scale [Q,Tp] instead of dividing [Q,C]).
    m = jnp.max(logits, axis=-1, keepdims=True)
    e = jnp.exp(logits - m)                                                        # [Bb, Q, C]
    num = jnp.einsum("bqc,bct->bqt", e, onehot,
                     preferred_element_type=jnp.float32)                           # [Bb, Q, Tp]
    inv_den = pl.reciprocal(jnp.sum(e, axis=-1, keepdims=True), approx=True)       # [Bb, Q, 1]
    c_class = -(num * inv_den)

    # cost_segment = torch.cdist(out_segment, tgt_segment, p=1)
    s1 = out_seg[:, :, 0:1]            # [Bb, Q, 1]
    e1 = out_seg[:, :, 1:2]
    s2 = tgt[:, 0:1, :]                # [Bb, 1, Tp]  (lane-contiguous, no transpose needed)
    e2 = tgt[:, 1:2, :]
    c_seg = jnp.abs(s1 - s2) + jnp.abs(e1 - e2)                                    # [Bb, Q, Tp]

    # cost_siou = -generalized 1D IoU of the length-scaled segments (scaling done in-kernel).
    # TODO(synk): exact parity with segment_utils.generalized_segment_iou not verifiable (no source).
    s1s, e1s = s1 * length, e1 * length
    s2s, e2s = s2 * length, e2 * length
    inter = jnp.maximum(jnp.minimum(e1s, e2s) - jnp.maximum(s1s, s2s), 0.0)
    union = (e1s - s1s) + (e2s - s2s) - inter
    enclose = jnp.maximum(e1s, e2s) - jnp.minimum(s1s, s2s)
    eps = jnp.float32(1e-8)
    iou = inter * pl.reciprocal(jnp.maximum(union, eps), approx=True)
    giou = iou - (enclose - union) * pl.reciprocal(jnp.maximum(enclose, eps), approx=True)
    c_siou = -giou

    out_ref[...] = (w_segment * c_seg + w_class * c_class + w_siou * c_siou).astype(out_ref.dtype)


# ---------------------------------------------------------------------------
# Wrapper
# ---------------------------------------------------------------------------
def _round_up(x, m):
    return ((x + m - 1) // m) * m


def _pick_batch_fold(B, Q, C, Tp, logits_itemsize):
    """Largest divisor of B that fits a conservative VMEM budget (double-buffered blocks),
    while keeping at least 2 grid blocks so both v7x TensorCores get work."""
    per_batch = 2 * (Q * C * logits_itemsize    # logits
                     + Q * 2 * 4                # segments
                     + 1 * 1 * 4                # length
                     + C * Tp * 2               # one-hot (bf16)
                     + 2 * Tp * 4               # target segments
                     + Q * Tp * 4)              # output
    budget = 16 << 20                           # safely under default scoped-VMEM on v5e/v6e/v7x
    cap = max(1, budget // max(per_batch, 1))
    best = 1
    for bb in range(1, B + 1):
        if B % bb == 0 and bb <= cap and (B // bb >= 2 or B == 1):
            best = bb
    return best


def compute_cost_matrix(pred_logits, pred_segments, lengths, tgt_onehot, tgt_segments,
                        *, cost_class=1.0, cost_segment=1.0, cost_siou=1.0):
    """Returns the per-batch cost matrix C with shape [B, Q, Tp] (Tp = padded target axis)."""
    B, Q, C = pred_logits.shape
    Tp = tgt_onehot.shape[-1]
    Bb = _pick_batch_fold(B, Q, C, Tp, int(pred_logits.dtype.itemsize))

    kernel = functools.partial(_cost_kernel, w_class=float(cost_class),
                               w_segment=float(cost_segment), w_siou=float(cost_siou))

    return pl.pallas_call(
        kernel,
        out_shape=jax.ShapeDtypeStruct((B, Q, Tp), jnp.float32),
        grid_spec=pltpu.PrefetchScalarGridSpec(
            num_scalar_prefetch=0,
            grid=(B // Bb,),
            in_specs=[
                pl.BlockSpec((Bb, Q, C), lambda i: (i, 0, 0)),    # pred logits (native dtype)
                pl.BlockSpec((Bb, Q, 2), lambda i: (i, 0, 0)),    # pred segments (normalized)
                pl.BlockSpec((Bb, 1, 1), lambda i: (i, 0, 0)),    # per-batch video length
                pl.BlockSpec((Bb, C, Tp), lambda i: (i, 0, 0)),   # per-batch one-hot targets (bf16)
                pl.BlockSpec((Bb, 2, Tp), lambda i: (i, 0, 0)),   # per-batch target segs [2, Tp]
            ],
            out_specs=pl.BlockSpec((Bb, Q, Tp), lambda i: (i, 0, 0)),
        ),
        compiler_params=pltpu.CompilerParams(dimension_semantics=("parallel",)),
    )(pred_logits, pred_segments, lengths, tgt_onehot, tgt_segments)


# ---------------------------------------------------------------------------
# Host-side optimal assignment (O(n^3) Jonker-Volgenant, scipy-compatible output)
# ---------------------------------------------------------------------------
def _linear_sum_assignment(cost):
    """Rectangular linear sum assignment (minimization). Returns (row_ind, col_ind) like scipy.
    TODO(synk): sequential data-dependent algorithm — no clean Pallas equivalent; host-side."""
    cost = np.asarray(cost, dtype=np.float64)
    if cost.size == 0 or cost.shape[0] == 0 or cost.shape[1] == 0:
        return np.zeros(0, np.int64), np.zeros(0, np.int64)
    transposed = cost.shape[0] > cost.shape[1]
    if transposed:
        cost = cost.T
    n, m = cost.shape                      # n <= m
    cost = cost - cost.min()               # constant shift: same argmin, keeps values non-negative
    a = np.zeros((n + 1, m + 1), dtype=np.float64)
    a[1:, 1:] = cost
    INF = float("inf")
    u = np.zeros(n + 1)
    v = np.zeros(m + 1)
    p = np.zeros(m + 1, dtype=np.int64)    # p[j] = row assigned to column j (1-based, 0 = none)
    way = np.zeros(m + 1, dtype=np.int64)
    for i in range(1, n + 1):
        p[0] = i
        j0 = 0
        minv = np.full(m + 1, INF)
        used = np.zeros(m + 1, dtype=bool)
        while True:
            used[j0] = True
            i0 = p[j0]
            delta = INF
            j1 = 0
            for j in range(1, m + 1):
                if not used[j]:
                    cur = a[i0, j] - u[i0] - v[j]
                    if cur < minv[j]:
                        minv[j] = cur
                        way[j] = j0
                    if minv[j] < delta:
                        delta = minv[j]
                        j1 = j
            for j in range(m + 1):
                if used[j]:
                    u[p[j]] += delta
                    v[j] -= delta
                else:
                    minv[j] -= delta
            j0 = j1
            if p[j0] == 0:
                break
        while j0 != 0:
            j1 = way[j0]
            p[j0] = p[j1]
            j0 = j1
    row_of_col = p[1:] - 1                 # 0-based assigned row per column, -1 if unassigned
    cols = np.nonzero(row_of_col >= 0)[0].astype(np.int64)
    rows = row_of_col[cols]
    if transposed:
        rows, cols = cols, rows
    order = np.argsort(rows, kind="stable")
    return rows[order].astype(np.int64), cols[order].astype(np.int64)


# ---------------------------------------------------------------------------
# Matcher
# ---------------------------------------------------------------------------
class HungarianMatcher:
    def __init__(self, cost_class=1.0, cost_segment=1.0, cost_siou=1.0):
        assert cost_class != 0 or cost_segment != 0, "all costs cant be 0"
        self.cost_class = cost_class
        self.cost_segment = cost_segment
        self.cost_siou = cost_siou

    def __call__(self, outputs, targets):
        pred_logits = outputs["pred_logits"]      # [B, Q, C]
        pred_segments = outputs["pred_segments"]  # [B, Q, 2]
        B, Q, C = pred_logits.shape

        sizes = [int(t["segments"].shape[0]) for t in targets]
        Tmax = max(sizes) if sizes else 0
        if Tmax == 0:
            empty = jnp.zeros((0,), jnp.int32)
            return [(empty, empty) for _ in targets]
        Tp = _round_up(Tmax, 128)   # lane-dense, per-batch padded target axis

        # Host-side packing of the ragged targets (mirrors the torch concatenation glue).
        lengths_np = np.zeros((B, 1, 1), np.float32)
        onehot_np = np.zeros((B, C, Tp), np.float32)
        tseg_np = np.zeros((B, 2, Tp), np.float32)
        for b, t in enumerate(targets):
            lengths_np[b, 0, 0] = float(np.asarray(t["length"]).reshape(-1)[0])
            sz = sizes[b]
            if sz:
                labels = np.asarray(t["labels"]).astype(np.int64).reshape(-1)
                onehot_np[b, labels, np.arange(sz)] = 1.0
                tseg_np[b, :, :sz] = np.asarray(t["segments"], np.float32).T

        cost = compute_cost_matrix(
            pred_logits,                                   # native dtype; cast in-kernel
            pred_segments.astype(jnp.float32),
            jnp.asarray(lengths_np),
            jnp.asarray(onehot_np, dtype=jnp.bfloat16),    # 0/1 values: exact in bf16
            jnp.asarray(tseg_np),
            cost_class=self.cost_class, cost_segment=self.cost_segment,
            cost_siou=self.cost_siou)
        cost_np = np.asarray(jax.block_until_ready(cost))  # [B, Q, Tp]

        indices = []
        for b, sz in enumerate(sizes):
            if sz == 0:
                indices.append((np.zeros(0, np.int64), np.zeros(0, np.int64)))
            else:
                indices.append(_linear_sum_assignment(cost_np[b, :, :sz]))
        # Note: int64 indices would require jax x64; int32 is sufficient for index tensors here.
        return [(jnp.asarray(i, dtype=jnp.int32), jnp.asarray(j, dtype=jnp.int32))
                for i, j in indices]


# ---------------------------------------------------------------------------
# Self-contained test
# ---------------------------------------------------------------------------
if __name__ == "__main__":
    B, Q, C = 2, 8, 16
    key = jax.random.PRNGKey(0)
    k1, k2, k3, k4, k5, k6 = jax.random.split(key, 6)

    pred_logits = jax.random.normal(k1, (B, Q, C), dtype=jnp.float32)
    start = jax.random.uniform(k2, (B, Q, 1), minval=0.0, maxval=0.6)
    width = jax.random.uniform(k3, (B, Q, 1), minval=0.05, maxval=0.4)
    pred_segments = jnp.concatenate([start, start + width], axis=-1)   # normalized (start, end)

    sizes = [3, 2]
    lengths = [jnp.asarray([100.0], dtype=jnp.float32), jnp.asarray([150.0], dtype=jnp.float32)]
    targets = []
    tkeys = jax.random.split(k4, B * 2)
    for b, sz in enumerate(sizes):
        labels = jax.random.randint(tkeys[2 * b], (sz,), 0, C)
        ts = jax.random.uniform(tkeys[2 * b + 1], (sz, 1), minval=0.0, maxval=0.6)
        tw = jax.random.uniform(jax.random.fold_in(k5, b), (sz, 1), minval=0.05, maxval=0.4)
        segments = jnp.concatenate([ts, ts + tw], axis=-1)
        targets.append({"labels": labels, "segments": segments, "length": lengths[b]})

    matcher = HungarianMatcher(cost_class=1.0, cost_segment=1.0, cost_siou=1.0)
    outputs = {"pred_logits": pred_logits, "pred_segments": pred_segments}
    indices = matcher(outputs, targets)
    for i, j in indices:
        jax.block_until_ready(i)
        jax.block_until_ready(j)
    print("KERNEL_OK")
</pallas_src>

<mosaic_0001>
module attributes {stable_mosaic.version = 11 : i64} {
  func.func @_cost_kernel(%arg0: i32, %arg1: memref<1x8x16xf32, #tpu.memory_space<vmem>>, %arg2: memref<1x8x2xf32, #tpu.memory_space<vmem>>, %arg3: memref<1x1x1xf32, #tpu.memory_space<vmem>>, %arg4: memref<1x16x128xbf16, #tpu.memory_space<vmem>>, %arg5: memref<1x2x128xf32, #tpu.memory_space<vmem>>, %arg6: memref<1x8x128xf32, #tpu.memory_space<vmem>>) attributes {dimension_semantics = [#tpu.dimension_semantics<parallel>], iteration_bounds = array<i64: 2>, scalar_prefetch = 0 : i64, scratch_operands = 0 : i64, tpu.core_type = #tpu.core_type<tc>, window_params = [{transform_indices = @transform_0, window_bounds = array<i64: 1, 8, 16>}, {transform_indices = @transform_1, window_bounds = array<i64: 1, 8, 2>}, {transform_indices = @transform_2, window_bounds = array<i64: 1, 1, 1>}, {transform_indices = @transform_3, window_bounds = array<i64: 1, 16, 128>}, {transform_indices = @transform_4, window_bounds = array<i64: 1, 2, 128>}, {transform_indices = @transform_5, window_bounds = array<i64: 1, 8, 128>}]} {
    %c0 = arith.constant 0 : index
    %c0_0 = arith.constant 0 : index
    %c0_1 = arith.constant 0 : index
    %0 = vector.load %arg1[%c0, %c0_0, %c0_1] : memref<1x8x16xf32, #tpu.memory_space<vmem>>, vector<1x8x16xf32>
    %c0_2 = arith.constant 0 : index
    %c0_3 = arith.constant 0 : index
    %c0_4 = arith.constant 0 : index
    %1 = vector.load %arg2[%c0_2, %c0_3, %c0_4] : memref<1x8x2xf32, #tpu.memory_space<vmem>>, vector<1x8x2xf32>
    %c0_5 = arith.constant 0 : index
    %c0_6 = arith.constant 0 : index
    %c0_7 = arith.constant 0 : index
    %2 = vector.load %arg3[%c0_5, %c0_6, %c0_7] : memref<1x1x1xf32, #tpu.memory_space<vmem>>, vector<1x1x1xf32>
    %c0_8 = arith.constant 0 : index
    %c0_9 = arith.constant 0 : index
    %c0_10 = arith.constant 0 : index
    %3 = vector.load %arg4[%c0_8, %c0_9, %c0_10] : memref<1x16x128xbf16, #tpu.memory_space<vmem>>, vector<1x16x128xbf16>
    %4 = arith.extf %3 : vector<1x16x128xbf16> to vector<1x16x128xf32>
    %c0_11 = arith.constant 0 : index
    %c0_12 = arith.constant 0 : index
    %c0_13 = arith.constant 0 : index
    %5 = vector.load %arg5[%c0_11, %c0_12, %c0_13] : memref<1x2x128xf32, #tpu.memory_space<vmem>>, vector<1x2x128xf32>
    %cst = arith.constant dense<0xFF800000> : vector<1x8xf32>
    %6 = vector.multi_reduction <maximumf>, %0, %cst [2] : vector<1x8x16xf32> to vector<1x8xf32>
    %7 = vector.shape_cast %6 : vector<1x8xf32> to vector<1x8x1xf32>
    %8 = vector.broadcast %7 : vector<1x8x1xf32> to vector<1x8x16xf32>
    %9 = arith.subf %0, %8 : vector<1x8x16xf32>
    %10 = math.exp %9 : vector<1x8x16xf32>
    "tpu.trace_start"() <{level = 10 : i32, message = "bqc,bct->bqt"}> : () -> ()
    %cst_14 = arith.constant dense<0.000000e+00> : vector<1x8x128xf32>
    %11 = tpu.matmul %10, %4, %cst_14 {dimension_numbers = #tpu.dot_dimension_numbers<[2], [1], [1], [2], [0, 0, 0, 1, 1, 2], [0], [0]>} : vector<1x8x16xf32>, vector<1x16x128xf32>, vector<1x8x128xf32> -> vector<1x8x128xf32>
    "tpu.trace_stop"() : () -> ()
    %cst_15 = arith.constant dense<0.000000e+00> : vector<1x8xf32>
    %12 = vector.multi_reduction <add>, %10, %cst_15 [2] : vector<1x8x16xf32> to vector<1x8xf32>
    %13 = vector.shape_cast %12 : vector<1x8xf32> to vector<1x8x1xf32>
    %14 = tpu.reciprocal %13 {approx = true} : vector<1x8x1xf32> -> vector<1x8x1xf32>
    %15 = vector.broadcast %14 : vector<1x8x1xf32> to vector<1x8x128xf32>
    %16 = arith.mulf %11, %15 : vector<1x8x128xf32>
    %cst_16 = arith.constant 0.000000e+00 : f32
    %17 = vector.broadcast %cst_16 : f32 to vector<1x8x128xf32>
    %18 = arith.subf %17, %16 : vector<1x8x128xf32>
    %19 = vector.extract_strided_slice %1 {offsets = [0, 0, 0], sizes = [1, 8, 1], strides = [1, 1, 1]} : vector<1x8x2xf32> to vector<1x8x1xf32>
    %20 = vector.extract_strided_slice %1 {offsets = [0, 0, 1], sizes = [1, 8, 1], strides = [1, 1, 1]} : vector<1x8x2xf32> to vector<1x8x1xf32>
    %21 = vector.extract_strided_slice %5 {offsets = [0, 0, 0], sizes = [1, 1, 128], strides = [1, 1, 1]} : vector<1x2x128xf32> to vector<1x1x128xf32>
    %22 = vector.extract_strided_slice %5 {offsets = [0, 1, 0], sizes = [1, 1, 128], strides = [1, 1, 1]} : vector<1x2x128xf32> to vector<1x1x128xf32>
    %23 = vector.broadcast %19 : vector<1x8x1xf32> to vector<1x8x128xf32>
    %24 = vector.broadcast %21 : vector<1x1x128xf32> to vector<1x8x128xf32>
    %25 = arith.subf %23, %24 : vector<1x8x128xf32>
    %26 = math.absf %25 : vector<1x8x128xf32>
    %27 = vector.broadcast %20 : vector<1x8x1xf32> to vector<1x8x128xf32>
    %28 = vector.broadcast %22 : vector<1x1x128xf32> to vector<1x8x128xf32>
    %29 = arith.subf %27, %28 : vector<1x8x128xf32>
    %30 = math.absf %29 : vector<1x8x128xf32>
    %31 = arith.addf %26, %30 : vector<1x8x128xf32>
    %32 = vector.broadcast %2 : vector<1x1x1xf32> to vector<1x8x1xf32>
    %33 = arith.mulf %19, %32 : vector<1x8x1xf32>
    %34 = vector.broadcast %2 : vector<1x1x1xf32> to vector<1x8x1xf32>
    %35 = arith.mulf %20, %34 : vector<1x8x1xf32>
    %36 = vector.broadcast %2 : vector<1x1x1xf32> to vector<1x1x128xf32>
    %37 = arith.mulf %21, %36 : vector<1x1x128xf32>
    %38 = vector.broadcast %2 : vector<1x1x1xf32> to vector<1x1x128xf32>
    %39 = arith.mulf %22, %38 : vector<1x1x128xf32>
    %40 = vector.broadcast %35 : vector<1x8x1xf32> to vector<1x8x128xf32>
    %41 = vector.broadcast %39 : vector<1x1x128xf32> to vector<1x8x128xf32>
    %42 = arith.minimumf %40, %41 : vector<1x8x128xf32>
    %43 = vector.broadcast %33 : vector<1x8x1xf32> to vector<1x8x128xf32>
    %44 = vector.broadcast %37 : vector<1x1x128xf32> to vector<1x8x128xf32>
    %45 = arith.maximumf %43, %44 : vector<1x8x128xf32>
    %46 = arith.subf %42, %45 : vector<1x8x128xf32>
    %cst_17 = arith.constant 0.000000e+00 : f32
    %47 = vector.broadcast %cst_17 : f32 to vector<1x8x128xf32>
    %48 = arith.maximumf %46, %47 : vector<1x8x128xf32>
    %49 = arith.subf %35, %33 : vector<1x8x1xf32>
    %50 = arith.subf %39, %37 : vector<1x1x128xf32>
    %51 = vector.broadcast %49 : vector<1x8x1xf32> to vector<1x8x128xf32>
    %52 = vector.broadcast %50 : vector<1x1x128xf32> to vector<1x8x128xf32>
    %53 = arith.addf %51, %52 : vector<1x8x128xf32>
    %54 = arith.subf %53, %48 : vector<1x8x128xf32>
    %55 = vector.broadcast %35 : vector<1x8x1xf32> to vector<1x8x128xf32>
    %56 = vector.broadcast %39 : vector<1x1x128xf32> to vector<1x8x128xf32>
    %57 = arith.maximumf %55, %56 : vector<1x8x128xf32>
    %58 = vector.broadcast %33 : vector<1x8x1xf32> to vector<1x8x128xf32>
    %59 = vector.broadcast %37 : vector<1x1x128xf32> to vector<1x8x128xf32>
    %60 = arith.minimumf %58, %59 : vector<1x8x128xf32>
    %61 = arith.subf %57, %60 : vector<1x8x128xf32>
    %cst_18 = arith.constant 9.99999993E-9 : f32
    %62 = vector.broadcast %cst_18 : f32 to vector<1x8x128xf32>
    %63 = arith.maximumf %54, %62 : vector<1x8x128xf32>
    %64 = tpu.reciprocal %63 {approx = true} : vector<1x8x128xf32> -> vector<1x8x128xf32>
    %65 = arith.mulf %48, %64 : vector<1x8x128xf32>
    %66 = arith.subf %61, %54 : vector<1x8x128xf32>
    %cst_19 = arith.constant 9.99999993E-9 : f32
    %67 = vector.broadcast %cst_19 : f32 to vector<1x8x128xf32>
    %68 = arith.maximumf %61, %67 : vector<1x8x128xf32>
    %69 = tpu.reciprocal %68 {approx = true} : vector<1x8x128xf32> -> vector<1x8x128xf32>
    %70 = arith.mulf %66, %69 : vector<1x8x128xf32>
    %71 = arith.subf %65, %70 : vector<1x8x128xf32>
    %cst_20 = arith.constant 0.000000e+00 : f32
    %72 = vector.broadcast %cst_20 : f32 to vector<1x8x128xf32>
    %73 = arith.subf %72, %71 : vector<1x8x128xf32>
    %cst_21 = arith.constant 1.000000e+00 : f32
    %74 = vector.broadcast %cst_21 : f32 to vector<1x8x128xf32>
    %75 = arith.mulf %74, %31 : vector<1x8x128xf32>
    %cst_22 = arith.constant 1.000000e+00 : f32
    %76 = vector.broadcast %cst_22 : f32 to vector<1x8x128xf32>
    %77 = arith.mulf %76, %18 : vector<1x8x128xf32>
    %78 = arith.addf %75, %77 : vector<1x8x128xf32>
    %cst_23 = arith.constant 1.000000e+00 : f32
    %79 = vector.broadcast %cst_23 : f32 to vector<1x8x128xf32>
    %80 = arith.mulf %79, %73 : vector<1x8x128xf32>
    %81 = arith.addf %78, %80 : vector<1x8x128xf32>
    %c0_24 = arith.constant 0 : index
    %c0_25 = arith.constant 0 : index
    %c0_26 = arith.constant 0 : index
    %82 = vector.load %arg6[%c0_24, %c0_25, %c0_26] : memref<1x8x128xf32, #tpu.memory_space<vmem>>, vector<1x8x128xf32>
    tpu.vector_store %arg6[%c0_24, %c0_25, %c0_26], %81 {strides = array<i32>} : memref<1x8x128xf32, #tpu.memory_space<vmem>>, vector<1x8x128xf32>,
    return
  }
  func.func @transform_0(%arg0: i32) -> (i32, i32, i32) {
    %c0_i32 = arith.constant 0 : i32
    %c0_i32_0 = arith.constant 0 : i32
    %c0_i32_1 = arith.constant 0 : i32
    return %arg0, %c0_i32, %c0_i32_0 : i32, i32, i32
  }
  func.func @transform_1(%arg0: i32) -> (i32, i32, i32) {
    %c0_i32 = arith.constant 0 : i32
    %c0_i32_0 = arith.constant 0 : i32
    %c0_i32_1 = arith.constant 0 : i32
    return %arg0, %c0_i32, %c0_i32_0 : i32, i32, i32
  }
  func.func @transform_2(%arg0: i32) -> (i32, i32, i32) {
    %c0_i32 = arith.constant 0 : i32
    %c0_i32_0 = arith.constant 0 : i32
    %c0_i32_1 = arith.constant 0 : i32
    return %arg0, %c0_i32, %c0_i32_0 : i32, i32, i32
  }
  func.func @transform_3(%arg0: i32) -> (i32, i32, i32) {
    %c0_i32 = arith.constant 0 : i32
    %c0_i32_0 = arith.constant 0 : i32
    %c0_i32_1 = arith.constant 0 : i32
    return %arg0, %c0_i32, %c0_i32_0 : i32, i32, i32
  }
  func.func @transform_4(%arg0: i32) -> (i32, i32, i32) {
    %c0_i32 = arith.constant 0 : i32
    %c0_i32_0 = arith.constant 0 : i32
    %c0_i32_1 = arith.constant 0 : i32
    return %arg0, %c0_i32, %c0_i32_0 : i32, i32, i32
  }
  func.func @transform_5(%arg0: i32) -> (i32, i32, i32) {
    %c0_i32 = arith.constant 0 : i32
    %c0_i32_0 = arith.constant 0 : i32
    %c0_i32_1 = arith.constant 0 : i32
    return %arg0, %c0_i32, %c0_i32_0 : i32, i32, i32
  }
}

</mosaic_0001>

<llo_original>
// kernel: tpu_custom_call.1
$region0: #{tpu_custom_call.1}
  #allocation0 [shape = 'u32[]', space=smem, size = 0x4, offset = 0x4, fixed_abs, tag = 'smem constant byte address 0x4 - core index']
  #allocation1 [shape = 'u32[144,128]{1,0:T(1,128)}', space=vmem, size = 0x12000, scoped, tag = 'internal scratch']
  %s0 = inlined_call_operand.vmem [shape: f32[2,8,16], index: 0, kind: input, shape index: {}]
  %s1 = inlined_call_operand.vmem [shape: f32[2,8,2], index: 1, kind: input, shape index: {}]
  %s2 = inlined_call_operand.vmem [shape: f32[2,1,1], index: 2, kind: input, shape index: {}]
  %s3 = inlined_call_operand.hbm [shape: bf16[2,16,128], index: 3, kind: input, shape index: {}]
  %s4 = inlined_call_operand.vmem [shape: f32[2,2,128], index: 4, kind: input, shape index: {}]
  %s5 = inlined_call_operand.hbm [shape: f32[2,8,128], index: 5, kind: output, shape index: {}]
  %s6 = sld [smem:[#allocation0]]
  $region57: #{tpu_custom_call.1} parent=0
    _
  %s8 = ssub.s32 1, %s6
  %s9 = scalar_select 0, %s8, %s6
  $region1: #{tpu_custom_call.1} parent=0
    #allocation2 [shape = 'u8[8192]{0}', space=vmem, size = 0x2000, scoped, tag = 'input window, operand 3']
    #allocation3 [shape = 's32[2]{0}', space=sflag, size = 0x8, scoped, tag = 'scoped memory for tpu_custom_call.1']
    #allocation4 [shape = 's32[2]{0}', space=sflag, size = 0x8, scoped, tag = 'scoped memory for tpu_custom_call.1']
    #allocation5 [shape = 'u8[8192]{0}', space=vmem, size = 0x2000, scoped, tag = 'output window, operand 0']
    %10 = vsyncpa [#allocation3], 0
    %s11 = scalar_lea.sflag [#allocation3], 1
    %12 = vsyncpa %s11, 0
    %13 = vsyncpa [#allocation4], 0
    %s14 = scalar_lea.sflag [#allocation4], 1
    %15 = vsyncpa %s14, 0
    loop: start=0, step=1, limit=4
    $region2: #{tpu_custom_call.1} parent=1 // loop_pre_header
      _
    $region3: #{tpu_custom_call.1} parent=1 // loop_header
      %s17 = sphi 0, %s21
      %p18 = scmp.ge.s32.totalorder %s17, 4
      %s27 = sphi 0, %s29
      %s30 = sphi 0, %s27
      %s31 = sphi 0, %s30
      %s47 = sphi 0, %s31
      %s53 = sphi 0, %s55
      %s56 = sphi 0, %s53
      %s57 = sphi 0, %s56
      %s73 = sphi 0, %s57
      %s79 = sphi 0, %s81
      %s82 = sphi 0, %s79
      %s83 = sphi 0, %s82
      %s99 = sphi 0, %s83
      %s105 = sphi 0, %s107
      %s108 = sphi 0, %s105
      %s109 = sphi 0, %s108
      %s125 = sphi 0, %s109
      %s131 = sphi 0, %s133
      %s134 = sphi 0, %s131
      %s135 = sphi 0, %s134
      %s151 = sphi 0, %s135
      %s157 = sphi 0, %s159
      %s160 = sphi 0, %s157
      %s161 = sphi 0, %s160
      %s177 = sphi 0, %s161
    $region4: #{tpu_custom_call.1} parent=1 // loop_header_branch
      %20 = sbr.rel (%p18) target = $region8
    $region5: #{tpu_custom_call.1} parent=1 // loop_body
      %s22 = ssub.s32 %s17, 1
      %s23 = ssub.s32 %s17, 2
      %s24 = sadd.s32 %s17, 1
      %s25 = ssub.s32 %s17, %s24
      %p26 = scmp.eq.s32.totalorder %s25, 0
      %s28 = sadd.s32 %s27, 1
      %s29 = scalar_select %p26, %s27, %s28
      %p32 = pneg %p26
      %p33 = scmp.eq.s32.totalorder %s17, 1
      %p34 = por %p32, %p33
      %p35 = scmp.ne.s32.totalorder %s27, %s30
      %p36 = scmp.eq.s32.totalorder %s17, 0
      %p37 = por %p35, %p36
      %p38 = scmp.ne.s32.totalorder %s27, %s30
      %p39 = scmp.eq.s32.totalorder %s22, 1
      %p40 = por %p38, %p39
      %p41 = scmp.ne.s32.totalorder %s30, %s31
      %p42 = scmp.eq.s32.totalorder %s22, 0
      %p43 = por %p41, %p42
      %p44 = scmp.ne.s32.totalorder %s30, %s31
      %p45 = scmp.eq.s32.totalorder %s23, 1
      %p46 = por %p44, %p45
      %p48 = scmp.ne.s32.totalorder %s31, %s47
      %p49 = scmp.eq.s32.totalorder %s23, 0
      %p50 = por %p48, %p49
      %s51 = ssub.s32 %s17, %s24
      %p52 = scmp.eq.s32.totalorder %s51, 0
      %s54 = sadd.s32 %s53, 1
      %s55 = scalar_select %p52, %s53, %s54
      %p58 = pneg %p52
      %p59 = scmp.eq.s32.totalorder %s17, 1
      %p60 = por %p58, %p59
      %p61 = scmp.ne.s32.totalorder %s53, %s56
      %p62 = scmp.eq.s32.totalorder %s17, 0
      %p63 = por %p61, %p62
      %p64 = scmp.ne.s32.totalorder %s53, %s56
      %p65 = scmp.eq.s32.totalorder %s22, 1
      %p66 = por %p64, %p65
      %p67 = scmp.ne.s32.totalorder %s56, %s57
      %p68 = scmp.eq.s32.totalorder %s22, 0
      %p69 = por %p67, %p68
      %p70 = scmp.ne.s32.totalorder %s56, %s57
      %p71 = scmp.eq.s32.totalorder %s23, 1
      %p72 = por %p70, %p71
      %p74 = scmp.ne.s32.totalorder %s57, %s73
      %p75 = scmp.eq.s32.totalorder %s23, 0
      %p76 = por %p74, %p75
      %s77 = ssub.s32 %s17, %s24
      %p78 = scmp.eq.s32.totalorder %s77, 0
      %s80 = sadd.s32 %s79, 1
      %s81 = scalar_select %p78, %s79, %s80
      %p84 = pneg %p78
      %p85 = scmp.eq.s32.totalorder %s17, 1
      %p86 = por %p84, %p85
      %p87 = scmp.ne.s32.totalorder %s79, %s82
      %p88 = scmp.eq.s32.totalorder %s17, 0
      %p89 = por %p87, %p88
      %p90 = scmp.ne.s32.totalorder %s79, %s82
      %p91 = scmp.eq.s32.totalorder %s22, 1
      %p92 = por %p90, %p91
      %p93 = scmp.ne.s32.totalorder %s82, %s83
      %p94 = scmp.eq.s32.totalorder %s22, 0
      %p95 = por %p93, %p94
      %p96 = scmp.ne.s32.totalorder %s82, %s83
      %p97 = scmp.eq.s32.totalorder %s23, 1
      %p98 = por %p96, %p97
      %p100 = scmp.ne.s32.totalorder %s83, %s99
      %p101 = scmp.eq.s32.totalorder %s23, 0
      %p102 = por %p100, %p101
      %s103 = ssub.s32 %s17, %s24
      %p104 = scmp.eq.s32.totalorder %s103, 0
      %s106 = sadd.s32 %s105, 1
      %s107 = scalar_select %p104, %s105, %s106
      %p110 = pneg %p104
      %p111 = scmp.eq.s32.totalorder %s17, 1
      %p112 = por %p110, %p111
      %p113 = scmp.ne.s32.totalorder %s105, %s108
      %p114 = scmp.eq.s32.totalorder %s17, 0
      %p115 = por %p113, %p114
      %p116 = scmp.ne.s32.totalorder %s105, %s108
      %p117 = scmp.eq.s32.totalorder %s22, 1
      %p118 = por %p116, %p117
      %p119 = scmp.ne.s32.totalorder %s108, %s109
      %p120 = scmp.eq.s32.totalorder %s22, 0
      %p121 = por %p119, %p120
      %p122 = scmp.ne.s32.totalorder %s108, %s109
      %p123 = scmp.eq.s32.totalorder %s23, 1
      %p124 = por %p122, %p123
      %p126 = scmp.ne.s32.totalorder %s109, %s125
      %p127 = scmp.eq.s32.totalorder %s23, 0
      %p128 = por %p126, %p127
      %s129 = ssub.s32 %s17, %s24
      %p130 = scmp.eq.s32.totalorder %s129, 0
      %s132 = sadd.s32 %s131, 1
      %s133 = scalar_select %p130, %s131, %s132
      %p136 = pneg %p130
      %p137 = scmp.eq.s32.totalorder %s17, 1
      %p138 = por %p136, %p137
      %p139 = scmp.ne.s32.totalorder %s131, %s134
      %p140 = scmp.eq.s32.totalorder %s17, 0
      %p141 = por %p139, %p140
      %p142 = scmp.ne.s32.totalorder %s131, %s134
      %p143 = scmp.eq.s32.totalorder %s22, 1
      %p144 = por %p142, %p143
      %p145 = scmp.ne.s32.totalorder %s134, %s135
      %p146 = scmp.eq.s32.totalorder %s22, 0
      %p147 = por %p145, %p146
      %p148 = scmp.ne.s32.totalorder %s134, %s135
      %p149 = scmp.eq.s32.totalorder %s23, 1
      %p150 = por %p148, %p149
      %p152 = scmp.ne.s32.totalorder %s135, %s151
      %p153 = scmp.eq.s32.totalorder %s23, 0
      %p154 = por %p152, %p153
      %s155 = ssub.s32 %s17, %s24
      %p156 = scmp.eq.s32.totalorder %s155, 0
      %s158 = sadd.s32 %s157, 1
      %s159 = scalar_select %p156, %s157, %s158
      %p162 = pneg %p156
      %p163 = scmp.eq.s32.totalorder %s17, 1
      %p164 = por %p162, %p163
      %p165 = scmp.ne.s32.totalorder %s157, %s160
      %p166 = scmp.eq.s32.totalorder %s17, 0
      %p167 = por %p165, %p166
      %p168 = scmp.ne.s32.totalorder %s157, %s160
      %p169 = scmp.eq.s32.totalorder %s22, 1
      %p170 = por %p168, %p169
      %p171 = scmp.ne.s32.totalorder %s160, %s161
      %p172 = scmp.eq.s32.totalorder %s22, 0
      %p173 = por %p171, %p172
      %p174 = scmp.ne.s32.totalorder %s160, %s161
      %p175 = scmp.eq.s32.totalorder %s23, 1
      %p176 = por %p174, %p175
      %p178 = scmp.ne.s32.totalorder %s161, %s177
      %p179 = scmp.eq.s32.totalorder %s23, 0
      %p180 = por %p178, %p179
      %p181 = scmp.le.s32.totalorder 1, %s17
      %p182 = scmp.lt.s32.totalorder %s17, 3
      %p183 = pnand %p181, %p182
      %p184 = pneg %p183
      // Predicated region
      $region9: #{tpu_custom_call.1} parent=5 // pred_check
        _
      $region10: #{tpu_custom_call.1} parent=5 // pred_check_branch
        %186 = sbr.rel (%p183) target = $region12
      $region11: #{tpu_custom_call.1} parent=5 // pred_region
        %s187 = ssub.s32 %s17, 1
      $region12: #{tpu_custom_call.1} parent=5 // pred_fallthru
        _
      %p188 = scmp.lt.s32.totalorder %s17, 2
      // Predicated region
      $region13: #{tpu_custom_call.1} parent=5 // pred_check
        %p189 = pneg %p188
      $region14: #{tpu_custom_call.1} parent=5 // pred_check_branch
        %191 = sbr.rel (%p189) target = $region16
      $region15: #{tpu_custom_call.1} parent=5 // pred_region
        // Predicated region
        $region17: #{tpu_custom_call.1} parent=15 // pred_check
          %p192 = pneg %p37
        $region18: #{tpu_custom_call.1} parent=15 // pred_check_branch
          %194 = sbr.rel (%p192) target = $region20
        $region19: #{tpu_custom_call.1} parent=15 // pred_region
          %p195 = scmp.lt.s32.totalorder %s17, 1
          %s196 = scalar_select %p195, %s17, 1
          %s197 = smul.addr %s196, 8
          %s198 = scalar_lea.vmem %s0, %s197
        $region20: #{tpu_custom_call.1} parent=15 // pred_fallthru
          _
        // Predicated region
        $region21: #{tpu_custom_call.1} parent=15 // pred_check
          %p199 = pneg %p63
        $region22: #{tpu_custom_call.1} parent=15 // pred_check_branch
          %201 = sbr.rel (%p199) target = $region24
        $region23: #{tpu_custom_call.1} parent=15 // pred_region
          %p202 = scmp.lt.s32.totalorder %s17, 1
          %s203 = scalar_select %p202, %s17, 1
          %s204 = smul.addr %s203, 8
          %s205 = scalar_lea.vmem %s1, %s204
        $region24: #{tpu_custom_call.1} parent=15 // pred_fallthru
          _
        // Predicated region
        $region25: #{tpu_custom_call.1} parent=15 // pred_check
          %p206 = pneg %p89
        $region26: #{tpu_custom_call.1} parent=15 // pred_check_branch
          %208 = sbr.rel (%p206) target = $region28
        $region27: #{tpu_custom_call.1} parent=15 // pred_region
          %p209 = scmp.lt.s32.totalorder %s17, 1
          %s210 = scalar_select %p209, %s17, 1
          %s211 = scalar_lea.vmem %s2, %s210
        $region28: #{tpu_custom_call.1} parent=15 // pred_fallthru
          _
        // Predicated region
        $region29: #{tpu_custom_call.1} parent=15 // pred_check
          %p212 = pneg %p115
        $region30: #{tpu_custom_call.1} parent=15 // pred_check_branch
          %214 = sbr.rel (%p212) target = $region32
        $region31: #{tpu_custom_call.1} parent=15 // pred_region
          %s215 = sand.u32 %s105, 1
          %s216 = scalar_lea.sflag [#allocation3], %s215
          %s217 = sand.u32 %s105, 1
          %s218 = smul.addr %s217, 8
          %s219 = scalar_lea.vmem [#allocation2], %s218
          %s221 = ssub.s32 128, 128
          %222 = vsyncadd %s216, %s221
          %s223 = smul.addr %s17, 2
          %s224 = smul.addr %s223, 64
          %s225 = scalar_lea.hbm %s3, %s224
          %s226 = sshll.u32 %s219, 4
          %s227 = int_to_ptr.vmem [resolvable:$true] %s226
          %232 = dma.hbm_to_vmem [thread:$0]  %s225, 128, %s227, %s216, 64, 64, 4
        $region32: #{tpu_custom_call.1} parent=15 // pred_fallthru
          _
        // Predicated region
        $region33: #{tpu_custom_call.1} parent=15 // pred_check
          %p233 = pneg %p141
        $region34: #{tpu_custom_call.1} parent=15 // pred_check_branch
          %235 = sbr.rel (%p233) target = $region36
        $region35: #{tpu_custom_call.1} parent=15 // pred_region
          %p236 = scmp.lt.s32.totalorder %s17, 1
          %s237 = scalar_select %p236, %s17, 1
          %s238 = smul.addr %s237, 2
          %s239 = scalar_lea.vmem %s4, %s238
        $region36: #{tpu_custom_call.1} parent=15 // pred_fallthru
          _
      $region16: #{tpu_custom_call.1} parent=5 // pred_fallthru
        _
      %p240 = scmp.le.s32.totalorder 1, %s17
      %p241 = scmp.lt.s32.totalorder %s17, 3
      %p242 = pnand %p240, %p241
      %p243 = pneg %p242
      // Predicated region
      $region37: #{tpu_custom_call.1} parent=5 // pred_check
        _
      $region38: #{tpu_custom_call.1} parent=5 // pred_check_branch
        %245 = sbr.rel (%p242) target = $region40
      $region39: #{tpu_custom_call.1} parent=5 // pred_region
        %s246 = ssub.s32 %s17, 1
        %s247 = sand.u32 %s108, 1
        %s248 = scalar_lea.sflag [#allocation3], %s247
        %s249 = sand.u32 %s108, 1
        %s250 = smul.addr %s249, 8
        %s251 = scalar_lea.vmem [#allocation2], %s250
        // Predicated region
        $region41: #{tpu_custom_call.1} parent=39 // pred_check
          %p252 = pneg %p121
        $region42: #{tpu_custom_call.1} parent=39 // pred_check_branch
          %254 = sbr.rel (%p252) target = $region44
        $region43: #{tpu_custom_call.1} parent=39 // pred_region
          %255 = dma.done %s248, 128
        $region44: #{tpu_custom_call.1} parent=39 // pred_fallthru
          _
        %p256 = scmp.lt.s32.totalorder %s22, 1
        %s257 = scalar_select %p256, %s22, 1
        %s258 = smul.addr %s257, 8
        %s259 = scalar_lea.vmem %s0, %s258
        %p260 = pneg %p43
        %p261 = pneg %p40
        %p262 = scmp.lt.s32.totalorder %s22, 1
        %s263 = scalar_select %p262, %s22, 1
        %s264 = smul.addr %s263, 8
        %s265 = scalar_lea.vmem %s1, %s264
        %p266 = pneg %p69
        %p267 = pneg %p66
        %p268 = scmp.lt.s32.totalorder %s22, 1
        %s269 = scalar_select %p268, %s22, 1
        %s270 = scalar_lea.vmem %s2, %s269
        %p271 = pneg %p95
        %p272 = pneg %p92
        %s273 = sand.u32 %s108, 1
        %s274 = scalar_lea.sflag [#allocation3], %s273
        %s275 = sand.u32 %s108, 1
        %s276 = smul.addr %s275, 8
        %s277 = scalar_lea.vmem [#allocation2], %s276
        %p278 = pneg %p121
        %p279 = pneg %p118
        %p280 = scmp.lt.s32.totalorder %s22, 1
        %s281 = scalar_select %p280, %s22, 1
        %s282 = smul.addr %s281, 2
        %s283 = scalar_lea.vmem %s4, %s282
        %p284 = pneg %p147
        %p285 = pneg %p144
        %p286 = pneg %p173
        %p287 = pneg %p170
        %s288 = sand.u32 %s160, 1
        %s289 = scalar_lea.sflag [#allocation4], %s288
        %s290 = sand.u32 %s160, 1
        %s291 = smul.addr %s290, 8
        %s292 = scalar_lea.vmem [#allocation5], %s291
        %p293 = scmp.lt.s32.totalorder %s22, 1
        %s294 = scalar_select %p293, %s22, 1
        %s295 = smul.addr %s294, 8
        %s296 = scalar_lea.vmem %s0, %s295
        %p297 = scmp.lt.s32.totalorder %s22, 1
        %s298 = scalar_select %p297, %s22, 1
        %s299 = smul.addr %s298, 8
        %s300 = scalar_lea.vmem %s1, %s299
        %p301 = scmp.lt.s32.totalorder %s22, 1
        %s302 = scalar_select %p301, %s22, 1
        %s303 = scalar_lea.vmem %s2, %s302
        %p304 = scmp.lt.s32.totalorder %s22, 1
        %s305 = scalar_select %p304, %s22, 1
        %s306 = smul.addr %s305, 2
        %s307 = scalar_lea.vmem %s4, %s306
        %v308 = vld [vmem:[%s296] sm:$0xff]
        %v309 = vld [vmem:[%s300] sm:$0xff]
        %v310 = vld [vmem:[%s303] sm:$0x1]
        %v311 = vld [vmem:[%s251] sm:$0xf]
        %v312 = vld [vmem:[%s251 + $0x4] sm:$0xf]
        %v313 = vunpack.c.l.bf16 %v311
        %v314 = vunpack.c.l.bf16 %v312
        %v315 = vld [vmem:[%s307] sm:$0x3]
        %vm316 = vcmask 130048
        %v317 = vsel %vm316, %v308, -inf
        %318 = vmax.xlane.f32.xlu0 %v317
        %v319 = vpop.xlane.xlu0 %318
        %v320 = vsub.f32 %v308, %v319
        %v321 = vmul.f32 %v320, 1.442695
        %v322 = vpow.pop %v321
        %v324 = vsel %vm316, %v322, 0
        %326 = vmatprep.subr.mxu0 0.0
        %327 = vmatpush1.msra.mxu0 0.0
        %328 = vmatprep.subr.mxu0 0.0
        %329 = vmatpush1.msra.mxu0 0.0
        %330 = vmatprep.subr.mxu0 0.0
        %331 = vmatpush1.msra.mxu0 0.0
        %332 = vmatprep.subr.mxu0 0.0
        %333 = vmatpush1.msra.mxu0 0.0
        %334 = vmatprep.subr.mxu0 0.0
        %335 = vmatpush1.msra.mxu0 0.0
        %336 = vmatprep.subr.mxu0 0.0
        %337 = vmatpush1.msra.mxu0 0.0
        %338 = vmatprep.subr.mxu0 0.0
        %339 = vmatpush1.msra.mxu0 0.0
        %340 = vmatprep.subr.mxu0 0.0
        %341 = vmatpush1.msra.mxu0 0.0
        %342 = vmatprep.subr.mxu0 0.0
        %343 = vmatpush1.msra.mxu0 0.0
        %344 = vmatprep.subr.mxu0 0.0
        %345 = vmatpush1.msra.mxu0 0.0
        %346 = vmatprep.subr.mxu0 0.0
        %347 = vmatpush1.msra.mxu0 0.0
        %348 = vmatprep.subr.mxu0 0.0
        %349 = vmatpush1.msra.mxu0 0.0
        %350 = vmatprep.subr.mxu0 0.0
        %351 = vmatpush1.msra.mxu0 0.0
        %352 = vmatprep.subr.mxu0 0.0
        %353 = vmatpush1.msra.mxu0 0.0
        %354 = vmatprep.subr.mxu0 0.0
        %355 = vmatpush1.msra.mxu0 %v314
        %356 = vmatprep.subr.mxu0 0.0
        %357 = vmatpush1.msra.mxu0 %v313
        %358 = vmatprep.subr.mxu0 0.0
        %359 = vmatpush2.msra.mxu0 0.0
        %360 = vmatprep.subr.mxu0 0.0
        %361 = vmatpush2.msra.mxu0 0.0
        %362 = vmatprep.subr.mxu0 0.0
        %363 = vmatpush2.msra.mxu0 0.0
        %364 = vmatprep.subr.mxu0 0.0
        %365 = vmatpush2.msra.mxu0 0.0
        %366 = vmatprep.subr.mxu0 0.0
        %367 = vmatpush2.msra.mxu0 0.0
        %368 = vmatprep.subr.mxu0 0.0
        %369 = vmatpush2.msra.mxu0 0.0
        %370 = vmatprep.subr.mxu0 0.0
        %371 = vmatpush2.msra.mxu0 0.0
        %372 = vmatprep.subr.mxu0 0.0
        %373 = vmatpush2.msra.mxu0 0.0
        %374 = vmatprep.subr.mxu0 0.0
        %375 = vmatpush2.msra.mxu0 0.0
        %376 = vmatprep.subr.mxu0 0.0
        %377 = vmatpush2.msra.mxu0 0.0
        %378 = vmatprep.subr.mxu0 0.0
        %379 = vmatpush2.msra.mxu0 0.0
        %380 = vmatprep.subr.mxu0 0.0
        %381 = vmatpush2.msra.mxu0 0.0
        %382 = vmatprep.subr.mxu0 0.0
        %383 = vmatpush2.msra.mxu0 0.0
        %384 = vmatprep.subr.mxu0 0.0
        %385 = vmatpush2.msra.mxu0 0.0
        %386 = vmatprep.subr.mxu0 0.0
        %387 = vmatpush2.msra.mxu0 0.0
        %388 = vmatprep.subr.mxu0 0.0
        %389 = vmatpush2.msra.mxu0 0.0
        %390 = vmatprep.mubr.f32.mxu0 0.0
        %391 = vmatmul.mubr.f32.gmra.mxu0 %v324
        %v392 = vpop.f32.mrf.mxu0
        %v393 = vadd.f32 0.0, %v392
        %v394 = vpop.f32.mrf.mxu0
        %395 = vdwg.mxu0
        %v396 = vsel %vm316, %v322, 0.0
        %397 = vadd.xlane.f32.xlu0 %v396
        %v398 = vpop.xlane.xlu0 %397
        %v399 = vrcp.pop %v398
        %v400 = vmul.f32 %v393, %v399
        %v401 = vsub.f32 0.0, %v400
        %403 = vset.pattern.permute.xlu0 0
        %404 = vperm.xlu0 %403, %v309
        %v405 = vpop.permute.xlu0 %404
        %v407 = vlaneseq
        %v408 = vshrl.u32 %v407, 7
        %v409 = vsub.s32 0, %v408
        %v410 = vrot.slane %v315, %v409
        %v411 = vsub.f32 %v405, %v410
        %v412 = vand.u32 2147483647, %v411
        %413 = vset.pattern.permute.xlu0 1
        %414 = vperm.xlu0 %413, %v309
        %v415 = vpop.permute.xlu0 %414
        %v417 = vlaneseq
        %v418 = vshrl.u32 %v417, 7
        %v419 = vsub.s32 1, %v418
        %v420 = vrot.slane %v315, %v419
        %v421 = vsub.f32 %v415, %v420
        %v422 = vand.u32 2147483647, %v421
        %v423 = vadd.f32 %v412, %v422
        %v425 = vlaneseq
        %v426 = vshrl.u32 %v425, 7
        %v427 = vsub.s32 0, %v426
        %v428 = vrot.slane %v310, %v427
        %v430 = vmul.f32 %v309, %v428
        %431 = vrot.lane.b32.xlu0 %v428, 1
        %v432 = vpop.permute.xlu0 %431
        %v434 = vmul.f32 %v309, %v432
        %435 = vset.pattern.permute.xlu0 0
        %436 = vperm.xlu0 %435, %v310
        %v437 = vpop.permute.xlu0 %436
        %v439 = vlaneseq
        %v440 = vshrl.u32 %v439, 7
        %v441 = vsub.s32 0, %v440
        %v442 = vrot.slane %v437, %v441
        %v443 = vmul.f32 %v315, %v442
        %445 = vset.pattern.permute.xlu0 1
        %446 = vperm.xlu0 %445, %v434
        %v447 = vpop.permute.xlu0 %446
        %v449 = vlaneseq
        %v450 = vshrl.u32 %v449, 7
        %v451 = vsub.s32 1, %v450
        %v452 = vrot.slane %v443, %v451
        %v453 = vmin.f32 %v447, %v452
        %455 = vset.pattern.permute.xlu0 0
        %456 = vperm.xlu0 %455, %v430
        %v457 = vpop.permute.xlu0 %456
        %v459 = vlaneseq
        %v460 = vshrl.u32 %v459, 7
        %v461 = vsub.s32 0, %v460
        %v462 = vrot.slane %v443, %v461
        %v463 = vmax.f32 %v457, %v462
        %v464 = vsub.f32 %v453, %v463
        %v465 = vmax.f32 %v464, 0.0
        %466 = vrot.lane.b32.xlu0 %v430, 1
        %v467 = vpop.permute.xlu0 %466
        %v469 = vsub.f32 %v434, %v467
        %v471 = vrot.slane %v443, 7
        %v473 = vsub.f32 %v443, %v471
        %475 = vset.pattern.permute.xlu0 1
        %476 = vperm.xlu0 %475, %v469
        %v477 = vpop.permute.xlu0 %476
        %v479 = vlaneseq
        %v480 = vshrl.u32 %v479, 7
        %v481 = vsub.s32 1, %v480
        %v482 = vrot.slane %v473, %v481
        %v483 = vadd.f32 %v477, %v482
        %v484 = vsub.f32 %v483, %v465
        %v485 = vmax.f32 %v447, %v452
        %v486 = vmin.f32 %v457, %v462
        %v487 = vsub.f32 %v485, %v486
        %v488 = vmax.f32 %v484, 1e-08
        %v489 = vrcp.pop %v488
        %v490 = vmul.f32 %v465, %v489
        %v491 = vsub.f32 %v487, %v484
        %v492 = vmax.f32 %v487, 1e-08
        %v493 = vrcp.pop %v492
        %v494 = vmul.f32 %v491, %v493
        %v495 = vsub.f32 %v490, %v494
        %v496 = vsub.f32 0.0, %v495
        %v497 = vadd.f32 %v423, %v401
        %v498 = vadd.f32 %v497, %v496
        %499 = vst [vmem:[%s292] sm:$0xff] %v498
        %s500 = sand.u32 %s160, 1
        %s501 = scalar_lea.sflag [#allocation4], %s500
        %s502 = sand.u32 %s160, 1
        %s503 = smul.addr %s502, 8
        %s504 = scalar_lea.vmem [#allocation5], %s503
        // Predicated region
        $region45: #{tpu_custom_call.1} parent=39 // pred_check
          %p505 = pneg %p170
        $region46: #{tpu_custom_call.1} parent=39 // pred_check_branch
          %507 = sbr.rel (%p505) target = $region48
        $region47: #{tpu_custom_call.1} parent=39 // pred_region
          %s509 = ssub.s32 128, 128
          %510 = vsyncadd %s501, %s509
          %s511 = smul.addr %s22, 128
          %s512 = scalar_lea.hbm %s5, %s511
          %s514 = sshll.u32 %s504, 4
          %s515 = int_to_ptr.vmem [resolvable:$true] %s514
          %517 = dma.vmem_to_hbm [thread:$0]  %s515, 128, %s512, %s501
        $region48: #{tpu_custom_call.1} parent=39 // pred_fallthru
          _
      $region40: #{tpu_custom_call.1} parent=5 // pred_fallthru
        _
      %p518 = scmp.le.s32.totalorder 2, %s17
      // Predicated region
      $region49: #{tpu_custom_call.1} parent=5 // pred_check
        %p519 = pneg %p518
      $region50: #{tpu_custom_call.1} parent=5 // pred_check_branch
        %521 = sbr.rel (%p519) target = $region52
      $region51: #{tpu_custom_call.1} parent=5 // pred_region
        %s522 = ssub.s32 %s17, 2
        // Predicated region
        $region53: #{tpu_custom_call.1} parent=51 // pred_check
          %p523 = pneg %p176
        $region54: #{tpu_custom_call.1} parent=51 // pred_check_branch
          %525 = sbr.rel (%p523) target = $region56
        $region55: #{tpu_custom_call.1} parent=51 // pred_region
          %s526 = sand.u32 %s161, 1
          %s527 = scalar_lea.sflag [#allocation4], %s526
          %s528 = sand.u32 %s161, 1
          %s529 = smul.addr %s528, 8
          %s530 = scalar_lea.vmem [#allocation5], %s529
          %531 = dma.done %s527, 128
        $region56: #{tpu_custom_call.1} parent=51 // pred_fallthru
          _
      $region52: #{tpu_custom_call.1} parent=5 // pred_fallthru
        _
    $region6: #{tpu_custom_call.1} parent=1 // loop_footer
      %s21 = sadd.s32 1, %s17
    $region7: #{tpu_custom_call.1} parent=1 // loop_footer_branch
      %16 = sbr.rel target = $region3
    $region8: #{tpu_custom_call.1} parent=1 // loop_exit
      _
    %532 = vsyncpa [#allocation3], 1
    %s533 = scalar_lea.sflag [#allocation3], 1
    %534 = vsyncpa %s533, 1
    %535 = vsyncpa [#allocation4], 1
    %s536 = scalar_lea.sflag [#allocation4], 1
    %537 = vsyncpa %s536, 1

</llo_original>
